<compile_context>
chip_gen: v7x
topology: tpu7x:2x2x1
jax: 0.10.0
libtpu: 0.0.40
codegen_flags: <defaults>
</compile_context>

<pallas_src>
import jax
import jax.numpy as jnp
import numpy as np
from jax.experimental import pallas as pl
from jax.experimental.pallas import tpu as pltpu

LABEL_SMOOTHING = 0.1


def _make_kernel(num_heads, num_chunks, n_true, num_classes, batch):
    """Build the kernel body for a fixed (static) head count / chunk count."""
    R = num_heads - 1
    eps = LABEL_SMOOTHING
    inv_n = 1.0 / float(n_true)
    inv_b = 1.0 / float(batch)
    inv_bc = 1.0 / float(batch * num_classes)

    def kernel(*refs):
        labels_ref = refs[0]                       # VMEM (B, 1) int32
        w_ref = refs[1]                            # SMEM (4,)  f32
        sat_ref = refs[2]                          # VMEM (B, tile_n) chunk
        uav_ref = refs[3]                          # VMEM (B, tile_n) chunk
        pred_refs = refs[4:4 + num_heads]          # H x VMEM (B, C)
        out_ref = refs[4 + num_heads]              # SMEM (5,)
        acc_ref = refs[5 + num_heads]              # VMEM (B, 1) f32 scratch

        k = pl.program_id(0)

        @pl.when(k == 0)
        def _init():
            acc_ref[...] = jnp.zeros_like(acc_ref)

        # ---- alignment-loss accumulation over this N-chunk (f32 accumulate) ----
        diff = sat_ref[...].astype(jnp.float32) - uav_ref[...].astype(jnp.float32)
        acc_ref[...] += jnp.sum(diff, axis=1, keepdims=True)

        @pl.when(k == num_chunks - 1)
        def _finalize():
            # alignment loss: MSE of the per-sample means
            d_mean = acc_ref[...] * inv_n                       # (B, 1)
            alignment = jnp.sum(d_mean * d_mean) * inv_b

            # label mask built in-kernel (no one-hot in HBM)
            labels = labels_ref[...]                            # (B, 1) int32
            cls_iota = jax.lax.broadcasted_iota(
                jnp.int32, (batch, num_classes), 1)
            label_mask = (cls_iota == labels).astype(jnp.float32)   # (B, C)

            ce = []
            sum_p = jnp.zeros((batch, num_classes), jnp.float32)
            sum_p_sq = jnp.float32(0.0)
            for h in range(num_heads):                          # small & static
                x = pred_refs[h][...].astype(jnp.float32)       # (B, C)
                m = jnp.max(x, axis=-1, keepdims=True)
                z = x - m
                ez = jnp.exp(z)
                s = jnp.sum(ez, axis=-1, keepdims=True)
                logp = z - jnp.log(s)
                # CE with label smoothing, mean over batch
                ce_h = ((-(1.0 - eps) * inv_b) * jnp.sum(label_mask * logp)
                        + (-(eps / num_classes) * inv_b) * jnp.sum(logp))
                ce.append(ce_h)
                if h >= 1:                                      # regional heads
                    p = ez * pl.reciprocal(s, approx=True)      # softmax (EUP)
                    sum_p = sum_p + p
                    sum_p_sq = sum_p_sq + jnp.sum(p * p)

            global_loss = ce[0]
            regional_loss = sum(ce[1:]) * (1.0 / R)

            # sum_{i<j} ||p_i - p_j||^2 = R * sum_i ||p_i||^2 - ||sum_i p_i||^2
            if R > 1:
                npairs = R * (R - 1) // 2
                pair_sq = R * sum_p_sq - jnp.sum(sum_p * sum_p)
                consistency = pair_sq * (inv_bc / npairs)
            else:
                consistency = jnp.float32(0.0)

            total = (w_ref[0] * global_loss + w_ref[1] * regional_loss
                     + w_ref[2] * alignment + w_ref[3] * consistency)

            out_ref[0] = global_loss
            out_ref[1] = regional_loss
            out_ref[2] = alignment
            out_ref[3] = consistency
            out_ref[4] = total

    return kernel


def fsra_crn_loss(global_pred, regional_preds, labels, sat_enhanced,
                  uav_enhanced, loss_weights, *, tile_n=None):
    """JAX wrapper reproducing FSRACRNLoss.forward semantics."""
    heads = [global_pred] + list(regional_preds)     # native dtype, no f32 copy
    H = len(heads)
    B, C = global_pred.shape

    sat_flat = sat_enhanced.reshape(B, -1)           # native dtype
    uav_flat = uav_enhanced.reshape(B, -1)
    n_true = sat_flat.shape[1]
    feat_itemsize = jnp.dtype(sat_flat.dtype).itemsize

    # Lane-aligned N-tile sized for a modest VMEM budget (fits v7x's 64 MiB,
    # leaves room for double-buffering of both feature-map inputs).
    if tile_n is None:
        budget = 8 * 1024 * 1024                     # bytes for sat+uav tiles x2
        max_tile = max(128, (budget // (4 * B * feat_itemsize)) // 128 * 128)
        tile_n = int(min(max_tile, pl.cdiv(n_true, 128) * 128))
    tile_n = max(128, (int(tile_n) // 128) * 128)
    n_pad = int(pl.cdiv(n_true, tile_n)) * tile_n
    if n_pad != n_true:                              # zero-pad: sums unaffected
        sat_flat = jnp.pad(sat_flat, ((0, 0), (0, n_pad - n_true)))
        uav_flat = jnp.pad(uav_flat, ((0, 0), (0, n_pad - n_true)))
    num_chunks = n_pad // tile_n

    labels_2d = labels.reshape(B, 1).astype(jnp.int32)
    w = jnp.array([loss_weights['global_loss'],
                   loss_weights['regional_loss'],
                   loss_weights['alignment_loss'],
                   loss_weights['consistency_loss']], dtype=jnp.float32)

    kernel = _make_kernel(H, num_chunks, n_true, C, B)

    in_specs = ([pl.BlockSpec((B, 1), lambda k: (0, 0)),              # labels
                 pl.BlockSpec(memory_space=pltpu.MemorySpace.SMEM),   # weights
                 pl.BlockSpec((B, tile_n), lambda k: (0, k)),         # sat chunk
                 pl.BlockSpec((B, tile_n), lambda k: (0, k))]         # uav chunk
                + [pl.BlockSpec((B, C), lambda k: (0, 0))             # resident
                   for _ in range(H)])                                # logits

    grid_spec = pltpu.PrefetchScalarGridSpec(
        num_scalar_prefetch=0,
        grid=(num_chunks,),
        in_specs=in_specs,
        out_specs=pl.BlockSpec(memory_space=pltpu.MemorySpace.SMEM),
        scratch_shapes=[pltpu.VMEM((B, 1), jnp.float32)],
    )

    pred_bytes = sum(h.size * jnp.dtype(h.dtype).itemsize for h in heads)
    est_vmem = (2 * 2 * B * tile_n * feat_itemsize   # sat/uav double-buffered
                + 2 * pred_bytes                     # resident logits blocks
                + 6 * B * C * 4                      # f32 softmax temporaries
                + 4 * B * 4 + 4096)
    vmem_limit = int(min(64 * 1024 * 1024, max(32 * 1024 * 1024, 2 * est_vmem)))

    cost = pl.CostEstimate(
        flops=2 * B * n_pad + 10 * H * B * C,
        transcendentals=H * B * C,
        bytes_accessed=(2 * B * n_pad * feat_itemsize + pred_bytes
                        + B * 4 + 4 * 4 + 5 * 4),
    )

    out = pl.pallas_call(
        kernel,
        out_shape=jax.ShapeDtypeStruct((5,), jnp.float32),
        grid_spec=grid_spec,
        compiler_params=pltpu.CompilerParams(
            dimension_semantics=("arbitrary",),
            vmem_limit_bytes=vmem_limit),
        cost_estimate=cost,
    )(labels_2d, w, sat_flat, uav_flat, *heads)

    return {'global_loss': out[0],
            'regional_loss': out[1],
            'alignment_loss': out[2],
            'consistency_loss': out[3],
            'total': out[4]}


def _reference(global_pred, regional_preds, labels, sat, uav, loss_weights):
    """Pure-JAX reference of the PyTorch forward (for self-check)."""
    B, C = global_pred.shape

    def ce(x, y):
        logp = jax.nn.log_softmax(x.astype(jnp.float32), axis=1)
        q = (1.0 - LABEL_SMOOTHING) * jax.nn.one_hot(y, C) + LABEL_SMOOTHING / C
        return -jnp.mean(jnp.sum(q * logp, axis=1))

    g = ce(global_pred, labels)
    r = sum(ce(p, labels) for p in regional_preds) / len(regional_preds)
    sat_g = jnp.mean(sat.reshape(B, -1).astype(jnp.float32), axis=1)
    uav_g = jnp.mean(uav.reshape(B, -1).astype(jnp.float32), axis=1)
    a = jnp.mean((sat_g - uav_g) ** 2)
    cons = 0.0
    R = len(regional_preds)
    for i in range(R):
        for j in range(i + 1, R):
            pi = jax.nn.softmax(regional_preds[i].astype(jnp.float32), axis=1)
            pj = jax.nn.softmax(regional_preds[j].astype(jnp.float32), axis=1)
            cons += jnp.mean((pi - pj) ** 2)
    cons /= R * (R - 1) / 2
    total = (loss_weights['global_loss'] * g + loss_weights['regional_loss'] * r
             + loss_weights['alignment_loss'] * a
             + loss_weights['consistency_loss'] * cons)
    return {'global_loss': g, 'regional_loss': r, 'alignment_loss': a,
            'consistency_loss': cons, 'total': total}


if __name__ == "__main__":
    key = jax.random.PRNGKey(0)
    B, NUM_CLASSES, R = 8, 128, 3          # small, lane-friendly demo shapes
    Cf, Hf, Wf = 4, 16, 16                 # enhanced feature maps (NCHW)

    ks = jax.random.split(key, 8)
    global_pred = jax.random.normal(ks[0], (B, NUM_CLASSES), jnp.float32)
    regional_preds = [jax.random.normal(ks[1 + r], (B, NUM_CLASSES), jnp.float32)
                      for r in range(R)]
    labels = jax.random.randint(ks[5], (B,), 0, NUM_CLASSES)
    sat_enhanced = jax.random.normal(ks[6], (B, Cf, Hf, Wf), jnp.float32)
    uav_enhanced = jax.random.normal(ks[7], (B, Cf, Hf, Wf), jnp.float32)

    loss_weights = {'global_loss': 1.0, 'regional_loss': 0.5,
                    'alignment_loss': 0.1, 'consistency_loss': 0.2}

    # Force a small N-tile so the multi-chunk (gridded) accumulation path is
    # exercised even at these tiny demo shapes (N = 1024 -> 4 chunks).
    losses = fsra_crn_loss(global_pred, regional_preds, labels,
                           sat_enhanced, uav_enhanced, loss_weights,
                           tile_n=256)
    jax.block_until_ready(losses)

    ref = _reference(global_pred, regional_preds, labels,
                     sat_enhanced, uav_enhanced, loss_weights)

    tols = {'global_loss': (1e-4, 1e-6),
            'regional_loss': (1e-4, 1e-6),
            'alignment_loss': (1e-4, 1e-6),
            'consistency_loss': (1e-2, 1e-6),   # approx reciprocal in softmax
            'total': (1e-3, 1e-5)}
    for k, (rt, at) in tols.items():
        np.testing.assert_allclose(np.asarray(losses[k]), np.asarray(ref[k]),
                                   rtol=rt, atol=at)

    print("KERNEL_OK")
</pallas_src>

<mosaic_0001>
module attributes {stable_mosaic.version = 11 : i64} {
  func.func @kernel(%arg0: i32, %arg1: memref<8x1xi32, #tpu.memory_space<vmem>>, %arg2: memref<4xf32, #tpu.memory_space<smem>>, %arg3: memref<8x256xf32, #tpu.memory_space<vmem>>, %arg4: memref<8x256xf32, #tpu.memory_space<vmem>>, %arg5: memref<8x128xf32, #tpu.memory_space<vmem>>, %arg6: memref<8x128xf32, #tpu.memory_space<vmem>>, %arg7: memref<8x128xf32, #tpu.memory_space<vmem>>, %arg8: memref<8x128xf32, #tpu.memory_space<vmem>>, %arg9: memref<5xf32, #tpu.memory_space<smem>>, %arg10: memref<8x1xf32, #tpu.memory_space<vmem>>) attributes {dimension_semantics = [#tpu.dimension_semantics<arbitrary>], iteration_bounds = array<i64: 4>, scalar_prefetch = 0 : i64, scratch_operands = 1 : i64, tpu.core_type = #tpu.core_type<tc>, window_params = [{pipeline_mode = #tpu.pipeline_mode<synchronous>, transform_indices = @transform_0, window_bounds = array<i64: 8, 1>}, {transform_indices = @transform_1, window_bounds = array<i64: 4>}, {transform_indices = @transform_2, window_bounds = array<i64: 8, 256>}, {transform_indices = @transform_3, window_bounds = array<i64: 8, 256>}, {pipeline_mode = #tpu.pipeline_mode<synchronous>, transform_indices = @transform_4, window_bounds = array<i64: 8, 128>}, {pipeline_mode = #tpu.pipeline_mode<synchronous>, transform_indices = @transform_5, window_bounds = array<i64: 8, 128>}, {pipeline_mode = #tpu.pipeline_mode<synchronous>, transform_indices = @transform_6, window_bounds = array<i64: 8, 128>}, {pipeline_mode = #tpu.pipeline_mode<synchronous>, transform_indices = @transform_7, window_bounds = array<i64: 8, 128>}, {transform_indices = @transform_8, window_bounds = array<i64: 5>}]} {
    %c0_i32 = arith.constant 0 : i32
    %0 = arith.cmpi eq, %arg0, %c0_i32 : i32
    %1 = arith.extui %0 : i1 to i32
    %c0_i32_0 = arith.constant 0 : i32
    %2 = arith.cmpi ne, %1, %c0_i32_0 : i32
    scf.if %2 {
      %cst_9 = arith.constant 0.000000e+00 : f32
      %14 = vector.broadcast %cst_9 : f32 to vector<8x1xf32>
      %c0_10 = arith.constant 0 : index
      %c0_11 = arith.constant 0 : index
      %15 = vector.load %arg10[%c0_10, %c0_11] : memref<8x1xf32, #tpu.memory_space<vmem>>, vector<8x1xf32>
      tpu.vector_store %arg10[%c0_10, %c0_11], %14 {strides = array<i32>} : memref<8x1xf32, #tpu.memory_space<vmem>>, vector<8x1xf32>,
    } else {
    }
    %c0 = arith.constant 0 : index
    %c0_1 = arith.constant 0 : index
    %3 = vector.load %arg3[%c0, %c0_1] : memref<8x256xf32, #tpu.memory_space<vmem>>, vector<8x256xf32>
    %c0_2 = arith.constant 0 : index
    %c0_3 = arith.constant 0 : index
    %4 = vector.load %arg4[%c0_2, %c0_3] : memref<8x256xf32, #tpu.memory_space<vmem>>, vector<8x256xf32>
    %5 = arith.subf %3, %4 : vector<8x256xf32>
    %c0_4 = arith.constant 0 : index
    %c0_5 = arith.constant 0 : index
    %6 = vector.load %arg10[%c0_4, %c0_5] : memref<8x1xf32, #tpu.memory_space<vmem>>, vector<8x1xf32>
    %cst = arith.constant dense<0.000000e+00> : vector<8xf32>
    %7 = vector.multi_reduction <add>, %5, %cst [1] : vector<8x256xf32> to vector<8xf32>
    %8 = vector.shape_cast %7 : vector<8xf32> to vector<8x1xf32>
    %9 = arith.addf %6, %8 : vector<8x1xf32>
    %c0_6 = arith.constant 0 : index
    %c0_7 = arith.constant 0 : index
    %10 = vector.load %arg10[%c0_6, %c0_7] : memref<8x1xf32, #tpu.memory_space<vmem>>, vector<8x1xf32>
    tpu.vector_store %arg10[%c0_6, %c0_7], %9 {strides = array<i32>} : memref<8x1xf32, #tpu.memory_space<vmem>>, vector<8x1xf32>,
    %c3_i32 = arith.constant 3 : i32
    %11 = arith.cmpi eq, %arg0, %c3_i32 : i32
    %12 = arith.extui %11 : i1 to i32
    %c0_i32_8 = arith.constant 0 : i32
    %13 = arith.cmpi ne, %12, %c0_i32_8 : i32
    scf.if %13 {
      %c0_9 = arith.constant 0 : index
      %c0_10 = arith.constant 0 : index
      %14 = vector.load %arg10[%c0_9, %c0_10] : memref<8x1xf32, #tpu.memory_space<vmem>>, vector<8x1xf32>
      %cst_11 = arith.constant 9.765625E-4 : f32
      %15 = vector.broadcast %cst_11 : f32 to vector<8x1xf32>
      %16 = arith.mulf %14, %15 : vector<8x1xf32>
      %17 = arith.mulf %16, %16 : vector<8x1xf32>
      %18 = vector.shape_cast %17 : vector<8x1xf32> to vector<1x8x1xf32>
      %cst_12 = arith.constant dense<0.000000e+00> : vector<1xf32>
      %19 = vector.multi_reduction <add>, %18, %cst_12 [1, 2] : vector<1x8x1xf32> to vector<1xf32>
      %20 = vector.shape_cast %19 : vector<1xf32> to vector<1x1x1xf32>
      %21 = vector.extract %20[0, 0, 0] : f32 from vector<1x1x1xf32>
      %cst_13 = arith.constant 1.250000e-01 : f32
      %22 = arith.mulf %21, %cst_13 : f32
      %c0_14 = arith.constant 0 : index
      %c0_15 = arith.constant 0 : index
      %23 = vector.load %arg1[%c0_14, %c0_15] : memref<8x1xi32, #tpu.memory_space<vmem>>, vector<8x1xi32>
      %24 = tpu.iota {dimensions = array<i32: 1>} : vector<8x128xi32>
      %25 = vector.broadcast %23 : vector<8x1xi32> to vector<8x128xi32>
      %26 = arith.cmpi eq, %24, %25 : vector<8x128xi32>
      %27 = arith.extui %26 : vector<8x128xi1> to vector<8x128xi32>
      %28 = arith.sitofp %27 : vector<8x128xi32> to vector<8x128xf32>
      %cst_16 = arith.constant 0.000000e+00 : f32
      %29 = vector.broadcast %cst_16 : f32 to vector<8x128xf32>
      %c0_17 = arith.constant 0 : index
      %c0_18 = arith.constant 0 : index
      %30 = vector.load %arg5[%c0_17, %c0_18] : memref<8x128xf32, #tpu.memory_space<vmem>>, vector<8x128xf32>
      %cst_19 = arith.constant dense<0xFF800000> : vector<8xf32>
      %31 = vector.multi_reduction <maximumf>, %30, %cst_19 [1] : vector<8x128xf32> to vector<8xf32>
      %32 = vector.shape_cast %31 : vector<8xf32> to vector<8x1xf32>
      %33 = vector.broadcast %32 : vector<8x1xf32> to vector<8x128xf32>
      %34 = arith.subf %30, %33 : vector<8x128xf32>
      %35 = math.exp %34 : vector<8x128xf32>
      %cst_20 = arith.constant dense<0.000000e+00> : vector<8xf32>
      %36 = vector.multi_reduction <add>, %35, %cst_20 [1] : vector<8x128xf32> to vector<8xf32>
      %37 = vector.shape_cast %36 : vector<8xf32> to vector<8x1xf32>
      %38 = math.log %37 : vector<8x1xf32>
      %39 = vector.broadcast %38 : vector<8x1xf32> to vector<8x128xf32>
      %40 = arith.subf %34, %39 : vector<8x128xf32>
      %41 = arith.mulf %28, %40 : vector<8x128xf32>
      %42 = vector.shape_cast %41 : vector<8x128xf32> to vector<1x8x128xf32>
      %cst_21 = arith.constant dense<0.000000e+00> : vector<1xf32>
      %43 = vector.multi_reduction <add>, %42, %cst_21 [1, 2] : vector<1x8x128xf32> to vector<1xf32>
      %44 = vector.shape_cast %43 : vector<1xf32> to vector<1x1x1xf32>
      %45 = vector.extract %44[0, 0, 0] : f32 from vector<1x1x1xf32>
      %cst_22 = arith.constant -1.125000e-01 : f32
      %46 = arith.mulf %cst_22, %45 : f32
      %47 = vector.shape_cast %40 : vector<8x128xf32> to vector<1x8x128xf32>
      %cst_23 = arith.constant dense<0.000000e+00> : vector<1xf32>
      %48 = vector.multi_reduction <add>, %47, %cst_23 [1, 2] : vector<1x8x128xf32> to vector<1xf32>
      %49 = vector.shape_cast %48 : vector<1xf32> to vector<1x1x1xf32>
      %50 = vector.extract %49[0, 0, 0] : f32 from vector<1x1x1xf32>
      %cst_24 = arith.constant -9.76562514E-5 : f32
      %51 = arith.mulf %cst_24, %50 : f32
      %52 = arith.addf %46, %51 : f32
      %c0_25 = arith.constant 0 : index
      %c0_26 = arith.constant 0 : index
      %53 = vector.load %arg6[%c0_25, %c0_26] : memref<8x128xf32, #tpu.memory_space<vmem>>, vector<8x128xf32>
      %cst_27 = arith.constant dense<0xFF800000> : vector<8xf32>
      %54 = vector.multi_reduction <maximumf>, %53, %cst_27 [1] : vector<8x128xf32> to vector<8xf32>
      %55 = vector.shape_cast %54 : vector<8xf32> to vector<8x1xf32>
      %56 = vector.broadcast %55 : vector<8x1xf32> to vector<8x128xf32>
      %57 = arith.subf %53, %56 : vector<8x128xf32>
      %58 = math.exp %57 : vector<8x128xf32>
      %cst_28 = arith.constant dense<0.000000e+00> : vector<8xf32>
      %59 = vector.multi_reduction <add>, %58, %cst_28 [1] : vector<8x128xf32> to vector<8xf32>
      %60 = vector.shape_cast %59 : vector<8xf32> to vector<8x1xf32>
      %61 = math.log %60 : vector<8x1xf32>
      %62 = vector.broadcast %61 : vector<8x1xf32> to vector<8x128xf32>
      %63 = arith.subf %57, %62 : vector<8x128xf32>
      %64 = arith.mulf %28, %63 : vector<8x128xf32>
      %65 = vector.shape_cast %64 : vector<8x128xf32> to vector<1x8x128xf32>
      %cst_29 = arith.constant dense<0.000000e+00> : vector<1xf32>
      %66 = vector.multi_reduction <add>, %65, %cst_29 [1, 2] : vector<1x8x128xf32> to vector<1xf32>
      %67 = vector.shape_cast %66 : vector<1xf32> to vector<1x1x1xf32>
      %68 = vector.extract %67[0, 0, 0] : f32 from vector<1x1x1xf32>
      %cst_30 = arith.constant -1.125000e-01 : f32
      %69 = arith.mulf %cst_30, %68 : f32
      %70 = vector.shape_cast %63 : vector<8x128xf32> to vector<1x8x128xf32>
      %cst_31 = arith.constant dense<0.000000e+00> : vector<1xf32>
      %71 = vector.multi_reduction <add>, %70, %cst_31 [1, 2] : vector<1x8x128xf32> to vector<1xf32>
      %72 = vector.shape_cast %71 : vector<1xf32> to vector<1x1x1xf32>
      %73 = vector.extract %72[0, 0, 0] : f32 from vector<1x1x1xf32>
      %cst_32 = arith.constant -9.76562514E-5 : f32
      %74 = arith.mulf %cst_32, %73 : f32
      %75 = arith.addf %69, %74 : f32
      %76 = tpu.reciprocal %60 {approx = true} : vector<8x1xf32> -> vector<8x1xf32>
      %77 = vector.broadcast %76 : vector<8x1xf32> to vector<8x128xf32>
      %78 = arith.mulf %58, %77 : vector<8x128xf32>
      %79 = arith.addf %29, %78 : vector<8x128xf32>
      %80 = arith.mulf %78, %78 : vector<8x128xf32>
      %81 = vector.shape_cast %80 : vector<8x128xf32> to vector<1x8x128xf32>
      %cst_33 = arith.constant dense<0.000000e+00> : vector<1xf32>
      %82 = vector.multi_reduction <add>, %81, %cst_33 [1, 2] : vector<1x8x128xf32> to vector<1xf32>
      %83 = vector.shape_cast %82 : vector<1xf32> to vector<1x1x1xf32>
      %84 = vector.extract %83[0, 0, 0] : f32 from vector<1x1x1xf32>
      %cst_34 = arith.constant 0.000000e+00 : f32
      %85 = arith.addf %cst_34, %84 : f32
      %c0_35 = arith.constant 0 : index
      %c0_36 = arith.constant 0 : index
      %86 = vector.load %arg7[%c0_35, %c0_36] : memref<8x128xf32, #tpu.memory_space<vmem>>, vector<8x128xf32>
      %cst_37 = arith.constant dense<0xFF800000> : vector<8xf32>
      %87 = vector.multi_reduction <maximumf>, %86, %cst_37 [1] : vector<8x128xf32> to vector<8xf32>
      %88 = vector.shape_cast %87 : vector<8xf32> to vector<8x1xf32>
      %89 = vector.broadcast %88 : vector<8x1xf32> to vector<8x128xf32>
      %90 = arith.subf %86, %89 : vector<8x128xf32>
      %91 = math.exp %90 : vector<8x128xf32>
      %cst_38 = arith.constant dense<0.000000e+00> : vector<8xf32>
      %92 = vector.multi_reduction <add>, %91, %cst_38 [1] : vector<8x128xf32> to vector<8xf32>
      %93 = vector.shape_cast %92 : vector<8xf32> to vector<8x1xf32>
      %94 = math.log %93 : vector<8x1xf32>
      %95 = vector.broadcast %94 : vector<8x1xf32> to vector<8x128xf32>
      %96 = arith.subf %90, %95 : vector<8x128xf32>
      %97 = arith.mulf %28, %96 : vector<8x128xf32>
      %98 = vector.shape_cast %97 : vector<8x128xf32> to vector<1x8x128xf32>
      %cst_39 = arith.constant dense<0.000000e+00> : vector<1xf32>
      %99 = vector.multi_reduction <add>, %98, %cst_39 [1, 2] : vector<1x8x128xf32> to vector<1xf32>
      %100 = vector.shape_cast %99 : vector<1xf32> to vector<1x1x1xf32>
      %101 = vector.extract %100[0, 0, 0] : f32 from vector<1x1x1xf32>
      %cst_40 = arith.constant -1.125000e-01 : f32
      %102 = arith.mulf %cst_40, %101 : f32
      %103 = vector.shape_cast %96 : vector<8x128xf32> to vector<1x8x128xf32>
      %cst_41 = arith.constant dense<0.000000e+00> : vector<1xf32>
      %104 = vector.multi_reduction <add>, %103, %cst_41 [1, 2] : vector<1x8x128xf32> to vector<1xf32>
      %105 = vector.shape_cast %104 : vector<1xf32> to vector<1x1x1xf32>
      %106 = vector.extract %105[0, 0, 0] : f32 from vector<1x1x1xf32>
      %cst_42 = arith.constant -9.76562514E-5 : f32
      %107 = arith.mulf %cst_42, %106 : f32
      %108 = arith.addf %102, %107 : f32
      %109 = tpu.reciprocal %93 {approx = true} : vector<8x1xf32> -> vector<8x1xf32>
      %110 = vector.broadcast %109 : vector<8x1xf32> to vector<8x128xf32>
      %111 = arith.mulf %91, %110 : vector<8x128xf32>
      %112 = arith.addf %79, %111 : vector<8x128xf32>
      %113 = arith.mulf %111, %111 : vector<8x128xf32>
      %114 = vector.shape_cast %113 : vector<8x128xf32> to vector<1x8x128xf32>
      %cst_43 = arith.constant dense<0.000000e+00> : vector<1xf32>
      %115 = vector.multi_reduction <add>, %114, %cst_43 [1, 2] : vector<1x8x128xf32> to vector<1xf32>
      %116 = vector.shape_cast %115 : vector<1xf32> to vector<1x1x1xf32>
      %117 = vector.extract %116[0, 0, 0] : f32 from vector<1x1x1xf32>
      %118 = arith.addf %85, %117 : f32
      %c0_44 = arith.constant 0 : index
      %c0_45 = arith.constant 0 : index
      %119 = vector.load %arg8[%c0_44, %c0_45] : memref<8x128xf32, #tpu.memory_space<vmem>>, vector<8x128xf32>
      %cst_46 = arith.constant dense<0xFF800000> : vector<8xf32>
      %120 = vector.multi_reduction <maximumf>, %119, %cst_46 [1] : vector<8x128xf32> to vector<8xf32>
      %121 = vector.shape_cast %120 : vector<8xf32> to vector<8x1xf32>
      %122 = vector.broadcast %121 : vector<8x1xf32> to vector<8x128xf32>
      %123 = arith.subf %119, %122 : vector<8x128xf32>
      %124 = math.exp %123 : vector<8x128xf32>
      %cst_47 = arith.constant dense<0.000000e+00> : vector<8xf32>
      %125 = vector.multi_reduction <add>, %124, %cst_47 [1] : vector<8x128xf32> to vector<8xf32>
      %126 = vector.shape_cast %125 : vector<8xf32> to vector<8x1xf32>
      %127 = math.log %126 : vector<8x1xf32>
      %128 = vector.broadcast %127 : vector<8x1xf32> to vector<8x128xf32>
      %129 = arith.subf %123, %128 : vector<8x128xf32>
      %130 = arith.mulf %28, %129 : vector<8x128xf32>
      %131 = vector.shape_cast %130 : vector<8x128xf32> to vector<1x8x128xf32>
      %cst_48 = arith.constant dense<0.000000e+00> : vector<1xf32>
      %132 = vector.multi_reduction <add>, %131, %cst_48 [1, 2] : vector<1x8x128xf32> to vector<1xf32>
      %133 = vector.shape_cast %132 : vector<1xf32> to vector<1x1x1xf32>
      %134 = vector.extract %133[0, 0, 0] : f32 from vector<1x1x1xf32>
      %cst_49 = arith.constant -1.125000e-01 : f32
      %135 = arith.mulf %cst_49, %134 : f32
      %136 = vector.shape_cast %129 : vector<8x128xf32> to vector<1x8x128xf32>
      %cst_50 = arith.constant dense<0.000000e+00> : vector<1xf32>
      %137 = vector.multi_reduction <add>, %136, %cst_50 [1, 2] : vector<1x8x128xf32> to vector<1xf32>
      %138 = vector.shape_cast %137 : vector<1xf32> to vector<1x1x1xf32>
      %139 = vector.extract %138[0, 0, 0] : f32 from vector<1x1x1xf32>
      %cst_51 = arith.constant -9.76562514E-5 : f32
      %140 = arith.mulf %cst_51, %139 : f32
      %141 = arith.addf %135, %140 : f32
      %142 = tpu.reciprocal %126 {approx = true} : vector<8x1xf32> -> vector<8x1xf32>
      %143 = vector.broadcast %142 : vector<8x1xf32> to vector<8x128xf32>
      %144 = arith.mulf %124, %143 : vector<8x128xf32>
      %145 = arith.addf %112, %144 : vector<8x128xf32>
      %146 = arith.mulf %144, %144 : vector<8x128xf32>
      %147 = vector.shape_cast %146 : vector<8x128xf32> to vector<1x8x128xf32>
      %cst_52 = arith.constant dense<0.000000e+00> : vector<1xf32>
      %148 = vector.multi_reduction <add>, %147, %cst_52 [1, 2] : vector<1x8x128xf32> to vector<1xf32>
      %149 = vector.shape_cast %148 : vector<1xf32> to vector<1x1x1xf32>
      %150 = vector.extract %149[0, 0, 0] : f32 from vector<1x1x1xf32>
      %151 = arith.addf %118, %150 : f32
      %cst_53 = arith.constant 0.000000e+00 : f32
      %152 = arith.addf %cst_53, %75 : f32
      %153 = arith.addf %152, %108 : f32
      %154 = arith.addf %153, %141 : f32
      %cst_54 = arith.constant 0.333333343 : f32
      %155 = arith.mulf %154, %cst_54 : f32
      %cst_55 = arith.constant 3.000000e+00 : f32
      %156 = arith.mulf %cst_55, %151 : f32
      %157 = arith.mulf %145, %145 : vector<8x128xf32>
      %158 = vector.shape_cast %157 : vector<8x128xf32> to vector<1x8x128xf32>
      %cst_56 = arith.constant dense<0.000000e+00> : vector<1xf32>
      %159 = vector.multi_reduction <add>, %158, %cst_56 [1, 2] : vector<1x8x128xf32> to vector<1xf32>
      %160 = vector.shape_cast %159 : vector<1xf32> to vector<1x1x1xf32>
      %161 = vector.extract %160[0, 0, 0] : f32 from vector<1x1x1xf32>
      %162 = arith.subf %156, %161 : f32
      %cst_57 = arith.constant 3.25520843E-4 : f32
      %163 = arith.mulf %162, %cst_57 : f32
      %c0_58 = arith.constant 0 : index
      %164 = memref.load %arg2[%c0_58] : memref<4xf32, #tpu.memory_space<smem>>
      %165 = arith.mulf %164, %52 : f32
      %c1 = arith.constant 1 : index
      %166 = memref.load %arg2[%c1] : memref<4xf32, #tpu.memory_space<smem>>
      %167 = arith.mulf %166, %155 : f32
      %168 = arith.addf %165, %167 : f32
      %c2 = arith.constant 2 : index
      %169 = memref.load %arg2[%c2] : memref<4xf32, #tpu.memory_space<smem>>
      %170 = arith.mulf %169, %22 : f32
      %171 = arith.addf %168, %170 : f32
      %c3 = arith.constant 3 : index
      %172 = memref.load %arg2[%c3] : memref<4xf32, #tpu.memory_space<smem>>
      %173 = arith.mulf %172, %163 : f32
      %174 = arith.addf %171, %173 : f32
      %c0_59 = arith.constant 0 : index
      %175 = memref.load %arg9[%c0_59] : memref<5xf32, #tpu.memory_space<smem>>
      memref.store %52, %arg9[%c0_59] : memref<5xf32, #tpu.memory_space<smem>>
      %c1_60 = arith.constant 1 : index
      %176 = memref.load %arg9[%c1_60] : memref<5xf32, #tpu.memory_space<smem>>
      memref.store %155, %arg9[%c1_60] : memref<5xf32, #tpu.memory_space<smem>>
      %c2_61 = arith.constant 2 : index
      %177 = memref.load %arg9[%c2_61] : memref<5xf32, #tpu.memory_space<smem>>
      memref.store %22, %arg9[%c2_61] : memref<5xf32, #tpu.memory_space<smem>>
      %c3_62 = arith.constant 3 : index
      %178 = memref.load %arg9[%c3_62] : memref<5xf32, #tpu.memory_space<smem>>
      memref.store %163, %arg9[%c3_62] : memref<5xf32, #tpu.memory_space<smem>>
      %c4 = arith.constant 4 : index
      %179 = memref.load %arg9[%c4] : memref<5xf32, #tpu.memory_space<smem>>
      memref.store %174, %arg9[%c4] : memref<5xf32, #tpu.memory_space<smem>>
    } else {
    }
    return
  }
  func.func @transform_0(%arg0: i32) -> (i32, i32) {
    %c0_i32 = arith.constant 0 : i32
    %c0_i32_0 = arith.constant 0 : i32
    %c0_i32_1 = arith.constant 0 : i32
    return %c0_i32, %c0_i32_0 : i32, i32
  }
  func.func @transform_1(%arg0: i32) -> i32 {
    %c0_i32 = arith.constant 0 : i32
    %c0_i32_0 = arith.constant 0 : i32
    return %c0_i32 : i32
  }
  func.func @transform_2(%arg0: i32) -> (i32, i32) {
    %c0_i32 = arith.constant 0 : i32
    %c0_i32_0 = arith.constant 0 : i32
    return %c0_i32, %arg0 : i32, i32
  }
  func.func @transform_3(%arg0: i32) -> (i32, i32) {
    %c0_i32 = arith.constant 0 : i32
    %c0_i32_0 = arith.constant 0 : i32
    return %c0_i32, %arg0 : i32, i32
  }
  func.func @transform_4(%arg0: i32) -> (i32, i32) {
    %c0_i32 = arith.constant 0 : i32
    %c0_i32_0 = arith.constant 0 : i32
    %c0_i32_1 = arith.constant 0 : i32
    return %c0_i32, %c0_i32_0 : i32, i32
  }
  func.func @transform_5(%arg0: i32) -> (i32, i32) {
    %c0_i32 = arith.constant 0 : i32
    %c0_i32_0 = arith.constant 0 : i32
    %c0_i32_1 = arith.constant 0 : i32
    return %c0_i32, %c0_i32_0 : i32, i32
  }
  func.func @transform_6(%arg0: i32) -> (i32, i32) {
    %c0_i32 = arith.constant 0 : i32
    %c0_i32_0 = arith.constant 0 : i32
    %c0_i32_1 = arith.constant 0 : i32
    return %c0_i32, %c0_i32_0 : i32, i32
  }
  func.func @transform_7(%arg0: i32) -> (i32, i32) {
    %c0_i32 = arith.constant 0 : i32
    %c0_i32_0 = arith.constant 0 : i32
    %c0_i32_1 = arith.constant 0 : i32
    return %c0_i32, %c0_i32_0 : i32, i32
  }
  func.func @transform_8(%arg0: i32) -> i32 {
    %c0_i32 = arith.constant 0 : i32
    %c0_i32_0 = arith.constant 0 : i32
    return %c0_i32 : i32
  }
}

</mosaic_0001>

<llo_original>
// kernel: tpu_custom_call.1
$region0: #{tpu_custom_call.1}
  #allocation0 [shape = 'u32[]', space=smem, size = 0x4, offset = 0x4, fixed_abs, tag = 'smem constant byte address 0x4 - core index']
  #allocation1 [shape = 'u32[144,128]{1,0:T(1,128)}', space=vmem, size = 0x12000, scoped, tag = 'internal scratch']
  #allocation2 [shape = 'f32[8,1]{1,0:T(8,128)}', space=vmem, size = 0x1000, scoped, tag = 'scratch operand']
  %s0 = inlined_call_operand.vmem [shape: s32[8,1], index: 0, kind: input, shape index: {}]
  %s1 = inlined_call_operand.hbm [shape: f32[4], index: 1, kind: input, shape index: {}]
  %s2 = inlined_call_operand.hbm [shape: f32[8,1024], index: 2, kind: input, shape index: {}]
  %s3 = inlined_call_operand.hbm [shape: f32[8,1024], index: 3, kind: input, shape index: {}]
  %s4 = inlined_call_operand.vmem [shape: f32[8,128], index: 4, kind: input, shape index: {}]
  %s5 = inlined_call_operand.vmem [shape: f32[8,128], index: 5, kind: input, shape index: {}]
  %s6 = inlined_call_operand.vmem [shape: f32[8,128], index: 6, kind: input, shape index: {}]
  %s7 = inlined_call_operand.vmem [shape: f32[8,128], index: 7, kind: input, shape index: {}]
  %s8 = inlined_call_operand.hbm [shape: f32[5], index: 8, kind: output, shape index: {}]
  %s9 = sld [smem:[#allocation0]]
  $region85: #{tpu_custom_call.1} parent=0
    _
  %s11 = ssub.s32 1, %s9
  %s12 = scalar_select 0, %s11, %s9
  $region1: #{tpu_custom_call.1} parent=0
    #allocation3 [shape = 'u8[512]{0}', space=smem, size = 0x200, scoped, tag = 'input window, operand 1, single buffered']
    #allocation4 [shape = 's32[2]{0}', space=sflag, size = 0x8, scoped, tag = 'scoped memory for tpu_custom_call.1']
    #allocation5 [shape = 's32[2]{0}', space=sflag, size = 0x8, scoped, tag = 'scoped memory for tpu_custom_call.1']
    #allocation6 [shape = 's32[2]{0}', space=sflag, size = 0x8, scoped, tag = 'scoped memory for tpu_custom_call.1']
    #allocation7 [shape = 'u8[16384]{0}', space=vmem, size = 0x4000, scoped, tag = 'input window, operand 2']
    #allocation8 [shape = 'u8[16384]{0}', space=vmem, size = 0x4000, scoped, tag = 'input window, operand 3']
    #allocation9 [shape = 's32[2]{0}', space=sflag, size = 0x8, scoped, tag = 'scoped memory for tpu_custom_call.1']
    #allocation10 [shape = 'u8[512]{0}', space=smem, size = 0x200, scoped, tag = 'output window, operand 0, single buffered']
    %13 = vsyncpa [#allocation5], 0
    %14 = vsyncpa [#allocation4], 0
    %s15 = scalar_lea.sflag [#allocation4], 1
    %16 = vsyncpa %s15, 0
    %17 = vsyncpa [#allocation9], 0
    %s18 = scalar_lea.sflag [#allocation9], 1
    %19 = vsyncpa %s18, 0
    %20 = vsyncpa [#allocation6], 0
    loop: start=0, step=1, limit=6
    $region2: #{tpu_custom_call.1} parent=1 // loop_pre_header
      _
    $region3: #{tpu_custom_call.1} parent=1 // loop_header
      %s22 = sphi 0, %s26
      %p23 = scmp.ge.s32.totalorder %s22, 6
      %s30 = sphi 0, %s30
      %s32 = sphi 0, %s30
      %s33 = sphi 0, %s32
      %s47 = sphi 0, %s33
      %s51 = sphi 0, %s51
      %s53 = sphi 0, %s51
      %s54 = sphi 0, %s53
      %s68 = sphi 0, %s54
      %s74 = sphi 0, %s76
      %s77 = sphi 0, %s74
      %s78 = sphi 0, %s77
      %s94 = sphi 0, %s78
      %s100 = sphi 0, %s102
      %s103 = sphi 0, %s100
      %s104 = sphi 0, %s103
      %s120 = sphi 0, %s104
      %s124 = sphi 0, %s124
      %s126 = sphi 0, %s124
      %s127 = sphi 0, %s126
      %s141 = sphi 0, %s127
      %s145 = sphi 0, %s145
      %s147 = sphi 0, %s145
      %s148 = sphi 0, %s147
      %s162 = sphi 0, %s148
      %s166 = sphi 0, %s166
      %s168 = sphi 0, %s166
      %s169 = sphi 0, %s168
      %s183 = sphi 0, %s169
      %s187 = sphi 0, %s187
      %s189 = sphi 0, %s187
      %s190 = sphi 0, %s189
      %s204 = sphi 0, %s190
      %s208 = sphi 0, %s208
      %s210 = sphi 0, %s208
      %s211 = sphi 0, %s210
      %s225 = sphi 0, %s211
    $region4: #{tpu_custom_call.1} parent=1 // loop_header_branch
      %25 = sbr.rel (%p23) target = $region8
    $region5: #{tpu_custom_call.1} parent=1 // loop_body
      %s27 = ssub.s32 %s22, 1
      %s28 = ssub.s32 %s22, 2
      %s29 = sadd.s32 %s22, 1
      %s31 = sadd.s32 %s30, 1
      %p34 = scmp.eq.s32.totalorder %s22, 3
      %p35 = scmp.ne.s32.totalorder %s30, %s32
      %p36 = scmp.eq.s32.totalorder %s22, 0
      %p37 = por %p35, %p36
      %p38 = scmp.ne.s32.totalorder %s30, %s32
      %p39 = scmp.eq.s32.totalorder %s27, 3
      %p40 = por %p38, %p39
      %p41 = scmp.ne.s32.totalorder %s32, %s33
      %p42 = scmp.eq.s32.totalorder %s27, 0
      %p43 = por %p41, %p42
      %p44 = scmp.ne.s32.totalorder %s32, %s33
      %p45 = scmp.eq.s32.totalorder %s28, 3
      %p46 = por %p44, %p45
      %p48 = scmp.ne.s32.totalorder %s33, %s47
      %p49 = scmp.eq.s32.totalorder %s28, 0
      %p50 = por %p48, %p49
      %s52 = sadd.s32 %s51, 1
      %p55 = scmp.eq.s32.totalorder %s22, 3
      %p56 = scmp.ne.s32.totalorder %s51, %s53
      %p57 = scmp.eq.s32.totalorder %s22, 0
      %p58 = por %p56, %p57
      %p59 = scmp.ne.s32.totalorder %s51, %s53
      %p60 = scmp.eq.s32.totalorder %s27, 3
      %p61 = por %p59, %p60
      %p62 = scmp.ne.s32.totalorder %s53, %s54
      %p63 = scmp.eq.s32.totalorder %s27, 0
      %p64 = por %p62, %p63
      %p65 = scmp.ne.s32.totalorder %s53, %s54
      %p66 = scmp.eq.s32.totalorder %s28, 3
      %p67 = por %p65, %p66
      %p69 = scmp.ne.s32.totalorder %s54, %s68
      %p70 = scmp.eq.s32.totalorder %s28, 0
      %p71 = por %p69, %p70
      %s72 = ssub.s32 %s22, %s29
      %p73 = scmp.eq.s32.totalorder %s72, 0
      %s75 = sadd.s32 %s74, 1
      %s76 = scalar_select %p73, %s74, %s75
      %p79 = pneg %p73
      %p80 = scmp.eq.s32.totalorder %s22, 3
      %p81 = por %p79, %p80
      %p82 = scmp.ne.s32.totalorder %s74, %s77
      %p83 = scmp.eq.s32.totalorder %s22, 0
      %p84 = por %p82, %p83
      %p85 = scmp.ne.s32.totalorder %s74, %s77
      %p86 = scmp.eq.s32.totalorder %s27, 3
      %p87 = por %p85, %p86
      %p88 = scmp.ne.s32.totalorder %s77, %s78
      %p89 = scmp.eq.s32.totalorder %s27, 0
      %p90 = por %p88, %p89
      %p91 = scmp.ne.s32.totalorder %s77, %s78
      %p92 = scmp.eq.s32.totalorder %s28, 3
      %p93 = por %p91, %p92
      %p95 = scmp.ne.s32.totalorder %s78, %s94
      %p96 = scmp.eq.s32.totalorder %s28, 0
      %p97 = por %p95, %p96
      %s98 = ssub.s32 %s22, %s29
      %p99 = scmp.eq.s32.totalorder %s98, 0
      %s101 = sadd.s32 %s100, 1
      %s102 = scalar_select %p99, %s100, %s101
      %p105 = pneg %p99
      %p106 = scmp.eq.s32.totalorder %s22, 3
      %p107 = por %p105, %p106
      %p108 = scmp.ne.s32.totalorder %s100, %s103
      %p109 = scmp.eq.s32.totalorder %s22, 0
      %p110 = por %p108, %p109
      %p111 = scmp.ne.s32.totalorder %s100, %s103
      %p112 = scmp.eq.s32.totalorder %s27, 3
      %p113 = por %p111, %p112
      %p114 = scmp.ne.s32.totalorder %s103, %s104
      %p115 = scmp.eq.s32.totalorder %s27, 0
      %p116 = por %p114, %p115
      %p117 = scmp.ne.s32.totalorder %s103, %s104
      %p118 = scmp.eq.s32.totalorder %s28, 3
      %p119 = por %p117, %p118
      %p121 = scmp.ne.s32.totalorder %s104, %s120
      %p122 = scmp.eq.s32.totalorder %s28, 0
      %p123 = por %p121, %p122
      %s125 = sadd.s32 %s124, 1
      %p128 = scmp.eq.s32.totalorder %s22, 3
      %p129 = scmp.ne.s32.totalorder %s124, %s126
      %p130 = scmp.eq.s32.totalorder %s22, 0
      %p131 = por %p129, %p130
      %p132 = scmp.ne.s32.totalorder %s124, %s126
      %p133 = scmp.eq.s32.totalorder %s27, 3
      %p134 = por %p132, %p133
      %p135 = scmp.ne.s32.totalorder %s126, %s127
      %p136 = scmp.eq.s32.totalorder %s27, 0
      %p137 = por %p135, %p136
      %p138 = scmp.ne.s32.totalorder %s126, %s127
      %p139 = scmp.eq.s32.totalorder %s28, 3
      %p140 = por %p138, %p139
      %p142 = scmp.ne.s32.totalorder %s127, %s141
      %p143 = scmp.eq.s32.totalorder %s28, 0
      %p144 = por %p142, %p143
      %s146 = sadd.s32 %s145, 1
      %p149 = scmp.eq.s32.totalorder %s22, 3
      %p150 = scmp.ne.s32.totalorder %s145, %s147
      %p151 = scmp.eq.s32.totalorder %s22, 0
      %p152 = por %p150, %p151
      %p153 = scmp.ne.s32.totalorder %s145, %s147
      %p154 = scmp.eq.s32.totalorder %s27, 3
      %p155 = por %p153, %p154
      %p156 = scmp.ne.s32.totalorder %s147, %s148
      %p157 = scmp.eq.s32.totalorder %s27, 0
      %p158 = por %p156, %p157
      %p159 = scmp.ne.s32.totalorder %s147, %s148
      %p160 = scmp.eq.s32.totalorder %s28, 3
      %p161 = por %p159, %p160
      %p163 = scmp.ne.s32.totalorder %s148, %s162
      %p164 = scmp.eq.s32.totalorder %s28, 0
      %p165 = por %p163, %p164
      %s167 = sadd.s32 %s166, 1
      %p170 = scmp.eq.s32.totalorder %s22, 3
      %p171 = scmp.ne.s32.totalorder %s166, %s168
      %p172 = scmp.eq.s32.totalorder %s22, 0
      %p173 = por %p171, %p172
      %p174 = scmp.ne.s32.totalorder %s166, %s168
      %p175 = scmp.eq.s32.totalorder %s27, 3
      %p176 = por %p174, %p175
      %p177 = scmp.ne.s32.totalorder %s168, %s169
      %p178 = scmp.eq.s32.totalorder %s27, 0
      %p179 = por %p177, %p178
      %p180 = scmp.ne.s32.totalorder %s168, %s169
      %p181 = scmp.eq.s32.totalorder %s28, 3
      %p182 = por %p180, %p181
      %p184 = scmp.ne.s32.totalorder %s169, %s183
      %p185 = scmp.eq.s32.totalorder %s28, 0
      %p186 = por %p184, %p185
      %s188 = sadd.s32 %s187, 1
      %p191 = scmp.eq.s32.totalorder %s22, 3
      %p192 = scmp.ne.s32.totalorder %s187, %s189
      %p193 = scmp.eq.s32.totalorder %s22, 0
      %p194 = por %p192, %p193
      %p195 = scmp.ne.s32.totalorder %s187, %s189
      %p196 = scmp.eq.s32.totalorder %s27, 3
      %p197 = por %p195, %p196
      %p198 = scmp.ne.s32.totalorder %s189, %s190
      %p199 = scmp.eq.s32.totalorder %s27, 0
      %p200 = por %p198, %p199
      %p201 = scmp.ne.s32.totalorder %s189, %s190
      %p202 = scmp.eq.s32.totalorder %s28, 3
      %p203 = por %p201, %p202
      %p205 = scmp.ne.s32.totalorder %s190, %s204
      %p206 = scmp.eq.s32.totalorder %s28, 0
      %p207 = por %p205, %p206
      %s209 = sadd.s32 %s208, 1
      %p212 = scmp.eq.s32.totalorder %s22, 3
      %p213 = scmp.ne.s32.totalorder %s208, %s210
      %p214 = scmp.eq.s32.totalorder %s22, 0
      %p215 = por %p213, %p214
      %p216 = scmp.ne.s32.totalorder %s208, %s210
      %p217 = scmp.eq.s32.totalorder %s27, 3
      %p218 = por %p216, %p217
      %p219 = scmp.ne.s32.totalorder %s210, %s211
      %p220 = scmp.eq.s32.totalorder %s27, 0
      %p221 = por %p219, %p220
      %p222 = scmp.ne.s32.totalorder %s210, %s211
      %p223 = scmp.eq.s32.totalorder %s28, 3
      %p224 = por %p222, %p223
      %p226 = scmp.ne.s32.totalorder %s211, %s225
      %p227 = scmp.eq.s32.totalorder %s28, 0
      %p228 = por %p226, %p227
      %p229 = scmp.le.s32.totalorder 1, %s22
      %p230 = scmp.lt.s32.totalorder %s22, 5
      %p231 = pnand %p229, %p230
      %p232 = pneg %p231
      // Predicated region
      $region9: #{tpu_custom_call.1} parent=5 // pred_check
        _
      $region10: #{tpu_custom_call.1} parent=5 // pred_check_branch
        %234 = sbr.rel (%p231) target = $region12
      $region11: #{tpu_custom_call.1} parent=5 // pred_region
        %s235 = ssub.s32 %s22, 1
        // Predicated region
        $region13: #{tpu_custom_call.1} parent=11 // pred_check
          %p236 = pneg %p43
        $region14: #{tpu_custom_call.1} parent=11 // pred_check_branch
          %238 = sbr.rel (%p236) target = $region16
        $region15: #{tpu_custom_call.1} parent=11 // pred_region
          _
        $region16: #{tpu_custom_call.1} parent=11 // pred_fallthru
          _
        // Predicated region
        $region17: #{tpu_custom_call.1} parent=11 // pred_check
          %p239 = pneg %p64
        $region18: #{tpu_custom_call.1} parent=11 // pred_check_branch
          %241 = sbr.rel (%p239) target = $region20
        $region19: #{tpu_custom_call.1} parent=11 // pred_region
          %s243 = ssub.s32 16, 16
          %244 = vsyncadd [#allocation5], %s243
          %247 = dma.hbm_to_smem %s1, 16, [#allocation3], [#allocation5]
        $region20: #{tpu_custom_call.1} parent=11 // pred_fallthru
          _
        // Predicated region
        $region21: #{tpu_custom_call.1} parent=11 // pred_check
          %p248 = pneg %p137
        $region22: #{tpu_custom_call.1} parent=11 // pred_check_branch
          %250 = sbr.rel (%p248) target = $region24
        $region23: #{tpu_custom_call.1} parent=11 // pred_region
          _
        $region24: #{tpu_custom_call.1} parent=11 // pred_fallthru
          _
        // Predicated region
        $region25: #{tpu_custom_call.1} parent=11 // pred_check
          %p251 = pneg %p158
        $region26: #{tpu_custom_call.1} parent=11 // pred_check_branch
          %253 = sbr.rel (%p251) target = $region28
        $region27: #{tpu_custom_call.1} parent=11 // pred_region
          _
        $region28: #{tpu_custom_call.1} parent=11 // pred_fallthru
          _
        // Predicated region
        $region29: #{tpu_custom_call.1} parent=11 // pred_check
          %p254 = pneg %p179
        $region30: #{tpu_custom_call.1} parent=11 // pred_check_branch
          %256 = sbr.rel (%p254) target = $region32
        $region31: #{tpu_custom_call.1} parent=11 // pred_region
          _
        $region32: #{tpu_custom_call.1} parent=11 // pred_fallthru
          _
        // Predicated region
        $region33: #{tpu_custom_call.1} parent=11 // pred_check
          %p257 = pneg %p200
        $region34: #{tpu_custom_call.1} parent=11 // pred_check_branch
          %259 = sbr.rel (%p257) target = $region36
        $region35: #{tpu_custom_call.1} parent=11 // pred_region
          _
        $region36: #{tpu_custom_call.1} parent=11 // pred_fallthru
          _
      $region12: #{tpu_custom_call.1} parent=5 // pred_fallthru
        _
      %p260 = scmp.lt.s32.totalorder %s22, 4
      // Predicated region
      $region37: #{tpu_custom_call.1} parent=5 // pred_check
        %p261 = pneg %p260
      $region38: #{tpu_custom_call.1} parent=5 // pred_check_branch
        %263 = sbr.rel (%p261) target = $region40
      $region39: #{tpu_custom_call.1} parent=5 // pred_region
        // Predicated region
        $region41: #{tpu_custom_call.1} parent=39 // pred_check
          %p264 = pneg %p84
        $region42: #{tpu_custom_call.1} parent=39 // pred_check_branch
          %266 = sbr.rel (%p264) target = $region44
        $region43: #{tpu_custom_call.1} parent=39 // pred_region
          %s267 = sand.u32 %s74, 1
          %s268 = scalar_lea.sflag [#allocation4], %s267
          %s269 = sand.u32 %s74, 1
          %s270 = smul.addr %s269, 16
          %s271 = scalar_lea.vmem [#allocation7], %s270
          %s272 = smul.u32 2, %s22
          %s274 = ssub.s32 256, 256
          %275 = vsyncadd %s268, %s274
          %s276 = smul.addr %s272, 128
          %s277 = scalar_lea.hbm %s2, %s276
          %s279 = sshll.u32 %s271, 4
          %s280 = int_to_ptr.vmem [resolvable:$true] %s279
          %282 = dma.hbm_to_vmem [thread:$0]  %s277, 256, %s280, %s268
        $region44: #{tpu_custom_call.1} parent=39 // pred_fallthru
          _
        // Predicated region
        $region45: #{tpu_custom_call.1} parent=39 // pred_check
          %p283 = pneg %p110
        $region46: #{tpu_custom_call.1} parent=39 // pred_check_branch
          %285 = sbr.rel (%p283) target = $region48
        $region47: #{tpu_custom_call.1} parent=39 // pred_region
          %s286 = sand.u32 %s100, 1
          %s287 = scalar_lea.sflag [#allocation9], %s286
          %s288 = sand.u32 %s100, 1
          %s289 = smul.addr %s288, 16
          %s290 = scalar_lea.vmem [#allocation8], %s289
          %s291 = smul.u32 2, %s22
          %s293 = ssub.s32 256, 256
          %294 = vsyncadd %s287, %s293
          %s295 = smul.addr %s291, 128
          %s296 = scalar_lea.hbm %s3, %s295
          %s298 = sshll.u32 %s290, 4
          %s299 = int_to_ptr.vmem [resolvable:$true] %s298
          %301 = dma.hbm_to_vmem [thread:$0]  %s296, 256, %s299, %s287
        $region48: #{tpu_custom_call.1} parent=39 // pred_fallthru
          _
      $region40: #{tpu_custom_call.1} parent=5 // pred_fallthru
        _
      %p302 = scmp.le.s32.totalorder 1, %s22
      %p303 = scmp.lt.s32.totalorder %s22, 5
      %p304 = pnand %p302, %p303
      %p305 = pneg %p304
      // Predicated region
      $region49: #{tpu_custom_call.1} parent=5 // pred_check
        _
      $region50: #{tpu_custom_call.1} parent=5 // pred_check_branch
        %307 = sbr.rel (%p304) target = $region52
      $region51: #{tpu_custom_call.1} parent=5 // pred_region
        %s308 = ssub.s32 %s22, 1
        // Predicated region
        $region53: #{tpu_custom_call.1} parent=51 // pred_check
          %p309 = pneg %p64
        $region54: #{tpu_custom_call.1} parent=51 // pred_check_branch
          %311 = sbr.rel (%p309) target = $region56
        $region55: #{tpu_custom_call.1} parent=51 // pred_region
          %312 = dma.done [#allocation5], 16
        $region56: #{tpu_custom_call.1} parent=51 // pred_fallthru
          _
        %s313 = sand.u32 %s77, 1
        %s314 = scalar_lea.sflag [#allocation4], %s313
        %s315 = sand.u32 %s77, 1
        %s316 = smul.addr %s315, 16
        %s317 = scalar_lea.vmem [#allocation7], %s316
        // Predicated region
        $region57: #{tpu_custom_call.1} parent=51 // pred_check
          %p318 = pneg %p90
        $region58: #{tpu_custom_call.1} parent=51 // pred_check_branch
          %320 = sbr.rel (%p318) target = $region60
        $region59: #{tpu_custom_call.1} parent=51 // pred_region
          %321 = dma.done %s314, 256
        $region60: #{tpu_custom_call.1} parent=51 // pred_fallthru
          _
        %s322 = sand.u32 %s103, 1
        %s323 = scalar_lea.sflag [#allocation9], %s322
        %s324 = sand.u32 %s103, 1
        %s325 = smul.addr %s324, 16
        %s326 = scalar_lea.vmem [#allocation8], %s325
        // Predicated region
        $region61: #{tpu_custom_call.1} parent=51 // pred_check
          %p327 = pneg %p116
        $region62: #{tpu_custom_call.1} parent=51 // pred_check_branch
          %329 = sbr.rel (%p327) target = $region64
        $region63: #{tpu_custom_call.1} parent=51 // pred_region
          %330 = dma.done %s323, 256
        $region64: #{tpu_custom_call.1} parent=51 // pred_fallthru
          _
        %331 = sfence
        %p332 = pneg %p43
        %p333 = pneg %p40
        %p334 = pneg %p64
        %p335 = pneg %p61
        %s336 = sand.u32 %s77, 1
        %s337 = scalar_lea.sflag [#allocation4], %s336
        %s338 = sand.u32 %s77, 1
        %s339 = smul.addr %s338, 16
        %s340 = scalar_lea.vmem [#allocation7], %s339
        %p341 = pneg %p90
        %p342 = pneg %p87
        %s343 = sand.u32 %s103, 1
        %s344 = scalar_lea.sflag [#allocation9], %s343
        %s345 = sand.u32 %s103, 1
        %s346 = smul.addr %s345, 16
        %s347 = scalar_lea.vmem [#allocation8], %s346
        %p348 = pneg %p116
        %p349 = pneg %p113
        %p350 = pneg %p137
        %p351 = pneg %p134
        %p352 = pneg %p158
        %p353 = pneg %p155
        %p354 = pneg %p179
        %p355 = pneg %p176
        %p356 = pneg %p200
        %p357 = pneg %p197
        %p358 = pneg %p221
        %p359 = pneg %p218
        %s360 = smul.u32 2, %s27
        %s361 = smul.u32 2, %s27
        %p362 = scmp.eq.s32.totalorder %s27, 0
        // Predicated region
        $region65: #{tpu_custom_call.1} parent=51 // pred_check
          %p363 = pneg %p362
        $region66: #{tpu_custom_call.1} parent=51 // pred_check_branch
          %365 = sbr.rel (%p363) target = $region68
        $region67: #{tpu_custom_call.1} parent=51 // pred_region
          %vm366 = vcmask 7168
          %367 = vst.msk [vmem:[#allocation2] sm:$0xff] %vm366, 0.0
        $region68: #{tpu_custom_call.1} parent=51 // pred_fallthru
          _
        %v368 = vld [vmem:[%s317] sm:$0xff]
        %v369 = vld [vmem:[%s317 + $0x8] sm:$0xff]
        %v370 = vld [vmem:[%s326] sm:$0xff]
        %v371 = vld [vmem:[%s326 + $0x8] sm:$0xff]
        %v372 = vsub.f32 %v368, %v370
        %v373 = vsub.f32 %v369, %v371
        %v374 = vld [vmem:[#allocation2] sm:$0xff]
        %v375 = vadd.f32 %v372, %v373
        %376 = vadd.xlane.f32.xlu0 %v375
        %v377 = vpop.xlane.xlu0 %376
        %v378 = vadd.f32 %v374, %v377
        %vm379 = vcmask 7168
        %380 = vst.msk [vmem:[#allocation2] sm:$0xff] %vm379, %v378
        %p381 = scmp.eq.s32.totalorder %s27, 3
        // Predicated region
        $region69: #{tpu_custom_call.1} parent=51 // pred_check
          %p382 = pneg %p381
        $region70: #{tpu_custom_call.1} parent=51 // pred_check_branch
          %384 = sbr.rel (%p382) target = $region72
        $region71: #{tpu_custom_call.1} parent=51 // pred_region
          %v385 = vld [vmem:[#allocation2] sm:$0xff]
          %v386 = vmul.f32 %v385, 0.0009765625
          %v387 = vmul.f32 %v386, %v386
          %v388 = vsel %vm379, %v387, 0.0
          %389 = vadd.xlane.f32.xlu0 %v388
          %v390 = vpop.xlane.xlu0 %389
          %v391 = vrot.slane %v390, 4
          %v392 = vadd.f32 %v390, %v391
          %v393 = vrot.slane %v392, 2
          %v394 = vadd.f32 %v392, %v393
          %v395 = vrot.slane %v394, 1
          %v396 = vadd.f32 %v394, %v395
          %s397 = vtos %v396
          %s398 = smul.f32 %s397, 0.125
          %v399 = vld [vmem:[%s0] sm:$0xff]
          %v400 = vlaneseq
          %v401 = vand.u32 %v400, 127
          %402 = vset.pattern.permute.xlu0 0
          %403 = vperm.xlu0 %402, %v399
          %v404 = vpop.permute.xlu0 %403
          %vm405 = vcmp.eq.s32.totalorder %v401, %v404
          %v406 = vsel %vm405, 1, 0
          %v407 = vcvt.s32.f32 %v406
          %v408 = vld [vmem:[%s4] sm:$0xff]
          %409 = vmax.xlane.f32.xlu0 %v408
          %v410 = vpop.xlane.xlu0 %409
          %v411 = vsub.f32 %v408, %v410
          %v412 = vmul.f32 %v411, 1.442695
          %v413 = vpow.pop %v412
          %414 = vadd.xlane.f32.xlu0 %v413
          %v415 = vpop.xlane.xlu0 %414
          %v416 = vlog2.pop %v415
          %v417 = vmul.f32 %v416, 0.6931472
          %v418 = vsub.f32 %v411, %v417
          %v419 = vmul.f32 %v407, %v418
          %420 = vadd.xlane.f32.xlu0 %v419
          %v421 = vpop.xlane.xlu0 %420
          %v422 = vrot.slane %v421, 4
          %v423 = vadd.f32 %v421, %v422
          %v424 = vrot.slane %v423, 2
          %v425 = vadd.f32 %v423, %v424
          %v426 = vrot.slane %v425, 1
          %v427 = vadd.f32 %v425, %v426
          %s428 = vtos %v427
          %s429 = smul.f32 %s428, -0.1125
          %430 = vadd.xlane.f32.xlu0 %v418
          %v431 = vpop.xlane.xlu0 %430
          %v432 = vrot.slane %v431, 4
          %v433 = vadd.f32 %v431, %v432
          %v434 = vrot.slane %v433, 2
          %v435 = vadd.f32 %v433, %v434
          %v436 = vrot.slane %v435, 1
          %v437 = vadd.f32 %v435, %v436
          %s438 = vtos %v437
          %s439 = smul.f32 %s438, -9.765625e-05
          %s440 = sadd.f32 %s429, %s439
          %v441 = vld [vmem:[%s5] sm:$0xff]
          %442 = vmax.xlane.f32.xlu0 %v441
          %v443 = vpop.xlane.xlu0 %442
          %v444 = vsub.f32 %v441, %v443
          %v445 = vmul.f32 %v444, 1.442695
          %v446 = vpow.pop %v445
          %447 = vadd.xlane.f32.xlu0 %v446
          %v448 = vpop.xlane.xlu0 %447
          %v449 = vlog2.pop %v448
          %v450 = vmul.f32 %v449, 0.6931472
          %v451 = vsub.f32 %v444, %v450
          %v452 = vmul.f32 %v407, %v451
          %453 = vadd.xlane.f32.xlu0 %v452
          %v454 = vpop.xlane.xlu0 %453
          %v455 = vrot.slane %v454, 4
          %v456 = vadd.f32 %v454, %v455
          %v457 = vrot.slane %v456, 2
          %v458 = vadd.f32 %v456, %v457
          %v459 = vrot.slane %v458, 1
          %v460 = vadd.f32 %v458, %v459
          %s461 = vtos %v460
          %s462 = smul.f32 %s461, -0.1125
          %463 = vadd.xlane.f32.xlu0 %v451
          %v464 = vpop.xlane.xlu0 %463
          %v465 = vrot.slane %v464, 4
          %v466 = vadd.f32 %v464, %v465
          %v467 = vrot.slane %v466, 2
          %v468 = vadd.f32 %v466, %v467
          %v469 = vrot.slane %v468, 1
          %v470 = vadd.f32 %v468, %v469
          %s471 = vtos %v470
          %s472 = smul.f32 %s471, -9.765625e-05
          %s473 = sadd.f32 %s462, %s472
          %v474 = vrcp.pop %v448
          %v475 = vmul.f32 %v446, %v474
          %v476 = vadd.f32 %v475, 0.0
          %v477 = vmul.f32 %v475, %v475
          %478 = vadd.xlane.f32.xlu0 %v477
          %v479 = vpop.xlane.xlu0 %478
          %v480 = vrot.slane %v479, 4
          %v481 = vadd.f32 %v479, %v480
          %v482 = vrot.slane %v481, 2
          %v483 = vadd.f32 %v481, %v482
          %v484 = vrot.slane %v483, 1
          %v485 = vadd.f32 %v483, %v484
          %s486 = vtos %v485
          %s487 = sadd.f32 %s486, 0.0
          %v488 = vld [vmem:[%s6] sm:$0xff]
          %489 = vmax.xlane.f32.xlu0 %v488
          %v490 = vpop.xlane.xlu0 %489
          %v491 = vsub.f32 %v488, %v490
          %v492 = vmul.f32 %v491, 1.442695
          %v493 = vpow.pop %v492
          %494 = vadd.xlane.f32.xlu0 %v493
          %v495 = vpop.xlane.xlu0 %494
          %v496 = vlog2.pop %v495
          %v497 = vmul.f32 %v496, 0.6931472
          %v498 = vsub.f32 %v491, %v497
          %v499 = vmul.f32 %v407, %v498
          %500 = vadd.xlane.f32.xlu0 %v499
          %v501 = vpop.xlane.xlu0 %500
          %v502 = vrot.slane %v501, 4
          %v503 = vadd.f32 %v501, %v502
          %v504 = vrot.slane %v503, 2
          %v505 = vadd.f32 %v503, %v504
          %v506 = vrot.slane %v505, 1
          %v507 = vadd.f32 %v505, %v506
          %s508 = vtos %v507
          %s509 = smul.f32 %s508, -0.1125
          %510 = vadd.xlane.f32.xlu0 %v498
          %v511 = vpop.xlane.xlu0 %510
          %v512 = vrot.slane %v511, 4
          %v513 = vadd.f32 %v511, %v512
          %v514 = vrot.slane %v513, 2
          %v515 = vadd.f32 %v513, %v514
          %v516 = vrot.slane %v515, 1
          %v517 = vadd.f32 %v515, %v516
          %s518 = vtos %v517
          %s519 = smul.f32 %s518, -9.765625e-05
          %s520 = sadd.f32 %s509, %s519
          %v521 = vrcp.pop %v495
          %v522 = vmul.f32 %v493, %v521
          %v523 = vadd.f32 %v476, %v522
          %v524 = vmul.f32 %v522, %v522
          %525 = vadd.xlane.f32.xlu0 %v524
          %v526 = vpop.xlane.xlu0 %525
          %v527 = vrot.slane %v526, 4
          %v528 = vadd.f32 %v526, %v527
          %v529 = vrot.slane %v528, 2
          %v530 = vadd.f32 %v528, %v529
          %v531 = vrot.slane %v530, 1
          %v532 = vadd.f32 %v530, %v531
          %s533 = vtos %v532
          %s534 = sadd.f32 %s487, %s533
          %v535 = vld [vmem:[%s7] sm:$0xff]
          %536 = vmax.xlane.f32.xlu0 %v535
          %v537 = vpop.xlane.xlu0 %536
          %v538 = vsub.f32 %v535, %v537
          %v539 = vmul.f32 %v538, 1.442695
          %v540 = vpow.pop %v539
          %541 = vadd.xlane.f32.xlu0 %v540
          %v542 = vpop.xlane.xlu0 %541
          %v543 = vlog2.pop %v542
          %v544 = vmul.f32 %v543, 0.6931472
          %v545 = vsub.f32 %v538, %v544
          %v546 = vmul.f32 %v407, %v545
          %547 = vadd.xlane.f32.xlu0 %v546
          %v548 = vpop.xlane.xlu0 %547
          %v549 = vrot.slane %v548, 4
          %v550 = vadd.f32 %v548, %v549
          %v551 = vrot.slane %v550, 2
          %v552 = vadd.f32 %v550, %v551
          %v553 = vrot.slane %v552, 1
          %v554 = vadd.f32 %v552, %v553
          %s555 = vtos %v554
          %s556 = smul.f32 %s555, -0.1125
          %557 = vadd.xlane.f32.xlu0 %v545
          %v558 = vpop.xlane.xlu0 %557
          %v559 = vrot.slane %v558, 4
          %v560 = vadd.f32 %v558, %v559
          %v561 = vrot.slane %v560, 2
          %v562 = vadd.f32 %v560, %v561
          %v563 = vrot.slane %v562, 1
          %v564 = vadd.f32 %v562, %v563
          %s565 = vtos %v564
          %s566 = smul.f32 %s565, -9.765625e-05
          %s567 = sadd.f32 %s556, %s566
          %v568 = vrcp.pop %v542
          %v569 = vmul.f32 %v540, %v568
          %v570 = vadd.f32 %v523, %v569
          %v571 = vmul.f32 %v569, %v569
          %572 = vadd.xlane.f32.xlu0 %v571
          %v573 = vpop.xlane.xlu0 %572
          %v574 = vrot.slane %v573, 4
          %v575 = vadd.f32 %v573, %v574
          %v576 = vrot.slane %v575, 2
          %v577 = vadd.f32 %v575, %v576
          %v578 = vrot.slane %v577, 1
          %v579 = vadd.f32 %v577, %v578
          %s580 = vtos %v579
          %s581 = sadd.f32 %s534, %s580
          %s582 = sadd.f32 %s473, 0.0
          %s583 = sadd.f32 %s582, %s520
          %s584 = sadd.f32 %s583, %s567
          %s585 = smul.f32 %s584, 0.33333334
          %s586 = smul.f32 %s581, 3.0
          %v587 = vmul.f32 %v570, %v570
          %588 = vadd.xlane.f32.xlu0 %v587
          %v589 = vpop.xlane.xlu0 %588
          %v590 = vrot.slane %v589, 4
          %v591 = vadd.f32 %v589, %v590
          %v592 = vrot.slane %v591, 2
          %v593 = vadd.f32 %v591, %v592
          %v594 = vrot.slane %v593, 1
          %v595 = vadd.f32 %v593, %v594
          %s596 = vtos %v595
          %s597 = ssub.f32 %s586, %s596
          %s598 = smul.f32 %s597, 0.00032552084
          %s599 = sld [smem:[#allocation3]]
          %s600 = smul.f32 %s599, %s440
          %s601 = sld [smem:[#allocation3 + $0x1]]
          %s602 = smul.f32 %s601, %s585
          %s603 = sadd.f32 %s600, %s602
          %s604 = sld [smem:[#allocation3 + $0x2]]
          %s605 = smul.f32 %s604, %s398
          %s606 = sadd.f32 %s603, %s605
          %s607 = sld [smem:[#allocation3 + $0x3]]
          %s608 = smul.f32 %s607, %s598
          %s609 = sadd.f32 %s606, %s608
          %s610 = scalar_lea.smem [#allocation10], 0
          %611 = sst [smem:[%s610]] %s440
          %s612 = scalar_lea.smem [#allocation10], 1
          %613 = sst [smem:[%s612]] %s585
          %s614 = scalar_lea.smem [#allocation10], 2
          %615 = sst [smem:[%s614]] %s398
          %s616 = scalar_lea.smem [#allocation10], 3
          %617 = sst [smem:[%s616]] %s598
          %s618 = scalar_lea.smem [#allocation10], 4
          %619 = sst [smem:[%s618]] %s609
        $region72: #{tpu_custom_call.1} parent=51 // pred_fallthru
          _
        // Predicated region
        $region73: #{tpu_custom_call.1} parent=51 // pred_check
          %p620 = pneg %p218
        $region74: #{tpu_custom_call.1} parent=51 // pred_check_branch
          %622 = sbr.rel (%p620) target = $region76
        $region75: #{tpu_custom_call.1} parent=51 // pred_region
          %s624 = ssub.s32 16, 16
          %625 = vsyncadd [#allocation6], %s624
          %628 = dma.smem_to_hbm [#allocation10], 16, %s8, [#allocation6]
        $region76: #{tpu_custom_call.1} parent=51 // pred_fallthru
          _
        // Predicated region
        $region77: #{tpu_custom_call.1} parent=51 // pred_check
          %p629 = pneg %p218
        $region78: #{tpu_custom_call.1} parent=51 // pred_check_branch
          %631 = sbr.rel (%p629) target = $region80
        $region79: #{tpu_custom_call.1} parent=51 // pred_region
          %632 = dma.done [#allocation6], 16
        $region80: #{tpu_custom_call.1} parent=51 // pred_fallthru
          _
        %633 = sfence
      $region52: #{tpu_custom_call.1} parent=5 // pred_fallthru
        _
      %p634 = scmp.le.s32.totalorder 2, %s22
      // Predicated region
      $region81: #{tpu_custom_call.1} parent=5 // pred_check
        %p635 = pneg %p634
      $region82: #{tpu_custom_call.1} parent=5 // pred_check_branch
        %637 = sbr.rel (%p635) target = $region84
      $region83: #{tpu_custom_call.1} parent=5 // pred_region
        %s638 = ssub.s32 %s22, 2
      $region84: #{tpu_custom_call.1} parent=5 // pred_fallthru
        _
    $region6: #{tpu_custom_call.1} parent=1 // loop_footer
      %s26 = sadd.s32 1, %s22
    $region7: #{tpu_custom_call.1} parent=1 // loop_footer_branch
      %21 = sbr.rel target = $region3
    $region8: #{tpu_custom_call.1} parent=1 // loop_exit
      _
    %639 = vsyncpa [#allocation4], 1
    %s640 = scalar_lea.sflag [#allocation4], 1
    %641 = vsyncpa %s640, 1
    %642 = vsyncpa [#allocation9], 1
    %s643 = scalar_lea.sflag [#allocation9], 1
    %644 = vsyncpa %s643, 1
    %645 = vsyncpa [#allocation5], 1
    %s646 = scalar_lea.sflag [#allocation5], 1
    %647 = vsyncpa %s646, 1
    %648 = vsyncpa [#allocation6], 1
    %s649 = scalar_lea.sflag [#allocation6], 1
    %650 = vsyncpa %s649, 1

</llo_original>
